<compile_context>
chip_gen: v6e
topology: v6e:2x2x1
jax: 0.10.0
libtpu: 0.0.40
codegen_flags: <defaults>
</compile_context>

<pallas_src>
import functools

import jax
import jax.numpy as jnp
from jax.experimental import pallas as pl
from jax.experimental.pallas import tpu as pltpu

_NEG_INF = -1e30  # large finite negative: masks invalid window positions before the max


def textcnn_kernel(emb_ref, mask_ref, w_ref, tmask_ref, b_ref, out_ref, *, compute_dtype):
    """Fused TextCNN forward for one batch tile.

    emb_ref  : (bt, L, E)   f32  token embeddings
    mask_ref : (bt, L)      f32  attention mask (1.0 / 0.0)
    w_ref    : (s_max*E, F_pad)  im2col conv weights, all branches (zero-padded taps)
    tmask_ref: (L, F_pad)   f32  additive time-validity mask (0 valid, -1e30 invalid)
    b_ref    : (1, F_pad)   f32  conv bias, all branches (zero-padded)
    out_ref  : (bt, F_pad)  f32  max-pooled features
    """
    bt, L, E = emb_ref.shape
    K, F_pad = w_ref.shape
    s_max = K // E

    # emb = emb * attention_mask  (f32 VPU math), then one cast to the MXU operand dtype.
    emb = (emb_ref[...] * mask_ref[...][:, :, None]).astype(compute_dtype)   # (bt, L, E)

    # Value-level im2col: tap k is emb circularly shifted by k along the time axis
    # (slices + sublane concat == roll).  Wrapped rows are finite and only appear at
    # window positions masked to -1e30 below, so they never win the max and never NaN.
    taps = [emb]
    for k in range(1, s_max):                   # s_max is tiny & static -> fully unrolled
        taps.append(jnp.concatenate([emb[:, k:, :], emb[:, :k, :]], axis=1))
    x = jnp.concatenate(taps, axis=-1).reshape(bt * L, K)     # (bt*L, s_max*E), full-lane

    # ONE MXU matmul for every branch at once, f32 accumulation.
    scores = jnp.dot(x, w_ref[...], preferred_element_type=jnp.float32)      # (bt*L, F_pad)

    # Mask windows that run past each branch's valid range, global max over time, then
    # add the bias AFTER the max (bias is constant over the time axis -> identical result).
    scores = scores.reshape(bt, L, F_pad) + tmask_ref[...][None, :, :]
    out_ref[...] = jnp.max(scores, axis=1) + b_ref[...]


def _build_fused_params(weights, biases, seq_len, compute_dtype, lanes=128):
    """Pack per-branch torch-layout Conv2d params into one fused im2col weight matrix.

    weights[i]: (F_i, 1, s_i, E) torch Conv2d layout; biases[i]: (F_i,).
    Returns w_im2col (s_max*E, F_pad), bias (1, F_pad), time-mask (L, F_pad), f_total.
    """
    sizes = [int(w.shape[2]) for w in weights]
    s_max = max(sizes)
    f_total = sum(int(w.shape[0]) for w in weights)
    f_pad = ((f_total + lanes - 1) // lanes) * lanes      # lane-dense output width

    w_cols, b_cols, m_cols = [], [], []
    for w, b in zip(weights, biases):
        f_out, _, s, e = w.shape
        wk = jnp.transpose(w[:, 0], (1, 2, 0))                  # (s, E, F_i)
        wk = jnp.pad(wk, ((0, s_max - s), (0, 0), (0, 0)))      # zero taps up to s_max
        w_cols.append(wk.reshape(s_max * e, f_out))
        b_cols.append(jnp.asarray(b, jnp.float32))
        n_valid = seq_len - s + 1                               # "valid" conv positions
        col = jnp.where(jnp.arange(seq_len) < n_valid, 0.0, _NEG_INF).astype(jnp.float32)
        m_cols.append(jnp.tile(col[:, None], (1, f_out)))       # (L, F_i)

    pad = f_pad - f_total
    w_fused = jnp.pad(jnp.concatenate(w_cols, axis=1), ((0, 0), (0, pad)))
    b_fused = jnp.pad(jnp.concatenate(b_cols, axis=0), ((0, pad),)).reshape(1, f_pad)
    t_mask = jnp.pad(jnp.concatenate(m_cols, axis=1), ((0, 0), (0, pad)))
    return w_fused.astype(compute_dtype), b_fused, t_mask, f_total


def _pick_batch_tile(batch, batch_tile):
    """Largest clean tile; keep >= 2 grid steps when cheap (v7x has 2 TensorCores)."""
    if batch > batch_tile and batch % batch_tile == 0 and batch_tile % 8 == 0:
        return batch_tile
    if batch % 16 == 0:
        return batch // 2      # two tiles: both v7x cores get work; negligible on v5e/v6e
    return batch               # single maximal tile (block == full dim is always legal)


@functools.partial(jax.jit, static_argnames=("compute_dtype", "batch_tile"))
def textcnn_forward(emb, attention_mask, weights, biases, *,
                    compute_dtype=jnp.bfloat16, batch_tile=256):
    """Fused TextCNN forward.  emb: (B, L, E) f32; attention_mask: (B, L) bool or None."""
    B, L, E = emb.shape
    w_fused, b_fused, t_mask, f_total = _build_fused_params(weights, biases, L, compute_dtype)
    K, F_pad = w_fused.shape

    if attention_mask is None:
        mask_f = jnp.ones((B, L), jnp.float32)
    else:
        mask_f = attention_mask.astype(jnp.float32)

    bt = _pick_batch_tile(B, batch_tile)
    grid = (B // bt,)

    # Explicit scoped-VMEM budget so the large tiles compile on every generation
    # (v5e scoped default ~16 MiB); 2x margin over the static estimate, capped well under
    # v7x's 64 MiB physical VMEM.
    cd_bytes = jnp.dtype(compute_dtype).itemsize
    est = (2 * bt * L * E * 4 + 2 * bt * L * 4 + 2 * bt * F_pad * 4   # double-buffered I/O
           + K * F_pad * cd_bytes + L * F_pad * 4 + F_pad * 4         # fused params
           + bt * L * K * cd_bytes + 2 * bt * L * F_pad * 4)          # im2col value + scores
    vmem_limit = int(min(max(2 * est + (4 << 20), 32 << 20), 48 << 20))

    out = pl.pallas_call(
        functools.partial(textcnn_kernel, compute_dtype=compute_dtype),
        out_shape=jax.ShapeDtypeStruct((B, F_pad), jnp.float32),
        grid=grid,
        in_specs=[
            pl.BlockSpec((bt, L, E), lambda i: (i, 0, 0)),     # batch-tiled embeddings
            pl.BlockSpec((bt, L), lambda i: (i, 0)),           # batch-tiled mask
            pl.BlockSpec((K, F_pad), lambda i: (0, 0)),        # fused im2col weights
            pl.BlockSpec((L, F_pad), lambda i: (0, 0)),        # time-validity mask
            pl.BlockSpec((1, F_pad), lambda i: (0, 0)),        # fused bias
        ],
        out_specs=pl.BlockSpec((bt, F_pad), lambda i: (i, 0)),
        compiler_params=pltpu.CompilerParams(
            dimension_semantics=("parallel",),                 # v7x: 2 TCs split the batch
            vmem_limit_bytes=vmem_limit,
        ),
    )(emb, mask_f, w_fused, t_mask, b_fused)

    # Dropout is identity in eval mode; drop the lane padding.
    return out[:, :f_total]


def textcnn_reference(emb, attention_mask, weights, biases):
    """Pure-JAX replica of the PyTorch forward (for the correctness check)."""
    x = emb
    if attention_mask is not None:
        x = x * attention_mask.astype(jnp.float32)[:, :, None]
    B, L, _ = x.shape
    outs = []
    for w, b in zip(weights, biases):            # w: (F, 1, s, E) torch layout, b: (F,)
        f_out, _, s, e = w.shape
        T = L - s + 1
        acc = jnp.zeros((B, T, f_out), jnp.float32)
        for k in range(s):
            acc = acc + jnp.einsum('bte,fe->btf', x[:, k:k + T, :], w[:, 0, k, :])
        acc = acc + b[None, None, :]
        outs.append(jnp.max(acc, axis=1))
    return jnp.concatenate(outs, axis=1)


if __name__ == "__main__":
    # CNNConfig: emb_dim=32, num_filters=[4, 4, 4], filter_sizes=[2, 3, 4]
    B, L, E = 16, 16, 32
    num_filters = [4, 4, 4]
    filter_sizes = [2, 3, 4]

    key = jax.random.PRNGKey(0)
    k_emb, k_mask, *k_params = jax.random.split(key, 2 + len(num_filters))

    # Snap test inputs to bf16-representable values so the check is independent of MXU
    # operand precision (kernel feeds bf16 operands; XLA's f32 reference matmul may also
    # run bf16 passes on TPU).  Mask is 0/1, so emb*mask stays bf16-exact.
    def snap(x):
        return x.astype(jnp.bfloat16).astype(jnp.float32)

    emb = snap(jax.random.normal(k_emb, (B, L, E), jnp.float32))
    attention_mask = jax.random.uniform(k_mask, (B, L)) > 0.2   # bool mask

    weights, biases = [], []
    for i, (f_out, s) in enumerate(zip(num_filters, filter_sizes)):
        kw, kb = jax.random.split(k_params[i])
        # torch Conv2d layout: weight (F, 1, s, E), bias (F,)
        weights.append(snap(0.1 * jax.random.normal(kw, (f_out, 1, s, E), jnp.float32)))
        biases.append(snap(0.1 * jax.random.normal(kb, (f_out,), jnp.float32)))

    out = jax.block_until_ready(textcnn_forward(emb, attention_mask, weights, biases))
    assert out.shape == (B, sum(num_filters)), out.shape

    ref = textcnn_reference(emb, attention_mask, weights, biases)
    err = float(jnp.max(jnp.abs(out - ref)))
    assert jnp.allclose(out, ref, atol=2e-3, rtol=2e-3), f"kernel mismatch, max err {err}"

    print("KERNEL_OK")
</pallas_src>

<mosaic_0001>
module attributes {stable_mosaic.version = 11 : i64} {
  func.func @textcnn_kernel(%arg0: i32, %arg1: memref<8x16x32xf32, #tpu.memory_space<vmem>>, %arg2: memref<8x16xf32, #tpu.memory_space<vmem>>, %arg3: memref<128x128xbf16, #tpu.memory_space<vmem>>, %arg4: memref<16x128xf32, #tpu.memory_space<vmem>>, %arg5: memref<1x128xf32, #tpu.memory_space<vmem>>, %arg6: memref<8x128xf32, #tpu.memory_space<vmem>>) attributes {dimension_semantics = [#tpu.dimension_semantics<parallel>], iteration_bounds = array<i64: 2>, scalar_prefetch = 0 : i64, scratch_operands = 0 : i64, tpu.core_type = #tpu.core_type<tc>, window_params = [{transform_indices = @transform_0, window_bounds = array<i64: 8, 16, 32>}, {transform_indices = @transform_1, window_bounds = array<i64: 8, 16>}, {pipeline_mode = #tpu.pipeline_mode<synchronous>, transform_indices = @transform_2, window_bounds = array<i64: 128, 128>}, {pipeline_mode = #tpu.pipeline_mode<synchronous>, transform_indices = @transform_3, window_bounds = array<i64: 16, 128>}, {pipeline_mode = #tpu.pipeline_mode<synchronous>, transform_indices = @transform_4, window_bounds = array<i64: 1, 128>}, {transform_indices = @transform_5, window_bounds = array<i64: 8, 128>}]} {
    %c0 = arith.constant 0 : index
    %c0_0 = arith.constant 0 : index
    %c0_1 = arith.constant 0 : index
    %0 = vector.load %arg1[%c0, %c0_0, %c0_1] : memref<8x16x32xf32, #tpu.memory_space<vmem>>, vector<8x16x32xf32>
    %c0_2 = arith.constant 0 : index
    %c0_3 = arith.constant 0 : index
    %1 = vector.load %arg2[%c0_2, %c0_3] : memref<8x16xf32, #tpu.memory_space<vmem>>, vector<8x16xf32>
    %2 = vector.shape_cast %1 : vector<8x16xf32> to vector<8x16x1xf32>
    %3 = vector.broadcast %2 : vector<8x16x1xf32> to vector<8x16x32xf32>
    %4 = arith.mulf %0, %3 : vector<8x16x32xf32>
    %5 = arith.truncf %4 : vector<8x16x32xf32> to vector<8x16x32xbf16>
    %6 = vector.extract_strided_slice %5 {offsets = [0, 1, 0], sizes = [8, 15, 32], strides = [1, 1, 1]} : vector<8x16x32xbf16> to vector<8x15x32xbf16>
    %7 = vector.extract_strided_slice %5 {offsets = [0, 0, 0], sizes = [8, 1, 32], strides = [1, 1, 1]} : vector<8x16x32xbf16> to vector<8x1x32xbf16>
    %8 = tpu.concatenate %6, %7 in 1 : vector<8x15x32xbf16>, vector<8x1x32xbf16> -> vector<8x16x32xbf16>
    %9 = vector.extract_strided_slice %5 {offsets = [0, 2, 0], sizes = [8, 14, 32], strides = [1, 1, 1]} : vector<8x16x32xbf16> to vector<8x14x32xbf16>
    %10 = vector.extract_strided_slice %5 {offsets = [0, 0, 0], sizes = [8, 2, 32], strides = [1, 1, 1]} : vector<8x16x32xbf16> to vector<8x2x32xbf16>
    %11 = tpu.concatenate %9, %10 in 1 : vector<8x14x32xbf16>, vector<8x2x32xbf16> -> vector<8x16x32xbf16>
    %12 = vector.extract_strided_slice %5 {offsets = [0, 3, 0], sizes = [8, 13, 32], strides = [1, 1, 1]} : vector<8x16x32xbf16> to vector<8x13x32xbf16>
    %13 = vector.extract_strided_slice %5 {offsets = [0, 0, 0], sizes = [8, 3, 32], strides = [1, 1, 1]} : vector<8x16x32xbf16> to vector<8x3x32xbf16>
    %14 = tpu.concatenate %12, %13 in 1 : vector<8x13x32xbf16>, vector<8x3x32xbf16> -> vector<8x16x32xbf16>
    %15 = tpu.concatenate %5, %8, %11, %14 in 2 : vector<8x16x32xbf16>, vector<8x16x32xbf16>, vector<8x16x32xbf16>, vector<8x16x32xbf16> -> vector<8x16x128xbf16>
    %16 = vector.shape_cast %15 : vector<8x16x128xbf16> to vector<128x128xbf16>
    %c0_4 = arith.constant 0 : index
    %c0_5 = arith.constant 0 : index
    %17 = vector.load %arg3[%c0_4, %c0_5] : memref<128x128xbf16, #tpu.memory_space<vmem>>, vector<128x128xbf16>
    %cst = arith.constant dense<0.000000e+00> : vector<128x128xf32>
    %18 = tpu.matmul %16, %17, %cst {dimension_numbers = #tpu.dot_dimension_numbers<[1], [0], [0], [1], [0, 0, 1, 1], [], []>} : vector<128x128xbf16>, vector<128x128xbf16>, vector<128x128xf32> -> vector<128x128xf32>
    %19 = vector.shape_cast %18 : vector<128x128xf32> to vector<8x16x128xf32>
    %c0_6 = arith.constant 0 : index
    %c0_7 = arith.constant 0 : index
    %20 = vector.load %arg4[%c0_6, %c0_7] : memref<16x128xf32, #tpu.memory_space<vmem>>, vector<16x128xf32>
    %21 = vector.shape_cast %20 : vector<16x128xf32> to vector<1x16x128xf32>
    %22 = vector.broadcast %21 : vector<1x16x128xf32> to vector<8x16x128xf32>
    %23 = arith.addf %19, %22 : vector<8x16x128xf32>
    %cst_8 = arith.constant dense<0xFF800000> : vector<8x128xf32>
    %24 = vector.multi_reduction <maximumf>, %23, %cst_8 [1] : vector<8x16x128xf32> to vector<8x128xf32>
    %c0_9 = arith.constant 0 : index
    %c0_10 = arith.constant 0 : index
    %25 = vector.load %arg5[%c0_9, %c0_10] : memref<1x128xf32, #tpu.memory_space<vmem>>, vector<1x128xf32>
    %26 = vector.broadcast %25 : vector<1x128xf32> to vector<8x128xf32>
    %27 = arith.addf %24, %26 : vector<8x128xf32>
    %c0_11 = arith.constant 0 : index
    %c0_12 = arith.constant 0 : index
    %28 = vector.load %arg6[%c0_11, %c0_12] : memref<8x128xf32, #tpu.memory_space<vmem>>, vector<8x128xf32>
    tpu.vector_store %arg6[%c0_11, %c0_12], %27 {strides = array<i32>} : memref<8x128xf32, #tpu.memory_space<vmem>>, vector<8x128xf32>,
    return
  }
  func.func @transform_0(%arg0: i32) -> (i32, i32, i32) {
    %c0_i32 = arith.constant 0 : i32
    %c0_i32_0 = arith.constant 0 : i32
    %c0_i32_1 = arith.constant 0 : i32
    return %arg0, %c0_i32, %c0_i32_0 : i32, i32, i32
  }
  func.func @transform_1(%arg0: i32) -> (i32, i32) {
    %c0_i32 = arith.constant 0 : i32
    %c0_i32_0 = arith.constant 0 : i32
    return %arg0, %c0_i32 : i32, i32
  }
  func.func @transform_2(%arg0: i32) -> (i32, i32) {
    %c0_i32 = arith.constant 0 : i32
    %c0_i32_0 = arith.constant 0 : i32
    %c0_i32_1 = arith.constant 0 : i32
    return %c0_i32, %c0_i32_0 : i32, i32
  }
  func.func @transform_3(%arg0: i32) -> (i32, i32) {
    %c0_i32 = arith.constant 0 : i32
    %c0_i32_0 = arith.constant 0 : i32
    %c0_i32_1 = arith.constant 0 : i32
    return %c0_i32, %c0_i32_0 : i32, i32
  }
  func.func @transform_4(%arg0: i32) -> (i32, i32) {
    %c0_i32 = arith.constant 0 : i32
    %c0_i32_0 = arith.constant 0 : i32
    %c0_i32_1 = arith.constant 0 : i32
    return %c0_i32, %c0_i32_0 : i32, i32
  }
  func.func @transform_5(%arg0: i32) -> (i32, i32) {
    %c0_i32 = arith.constant 0 : i32
    %c0_i32_0 = arith.constant 0 : i32
    return %arg0, %c0_i32 : i32, i32
  }
}

</mosaic_0001>

<llo_original>
// kernel: textcnn_forward.1
$region0: #{textcnn_forward.1}
  #allocation0 [shape = 'u32[]', space=smem, size = 0x4, offset = 0x4, fixed_abs, tag = 'smem constant byte address 0x4 - core index']
  #allocation1 [shape = 'u32[144,128]{1,0:T(1,128)}', space=vmem, size = 0x12000, scoped, tag = 'internal scratch']
  %s0 = inlined_call_operand.vmem [shape: f32[16,16,32], index: 0, kind: input, shape index: {}]
  %s1 = inlined_call_operand.vmem [shape: f32[16,16], index: 1, kind: input, shape index: {}]
  %s2 = inlined_call_operand.vmem [shape: bf16[128,128], index: 2, kind: input, shape index: {}]
  %s3 = inlined_call_operand.vmem [shape: f32[16,128], index: 3, kind: input, shape index: {}]
  %s4 = inlined_call_operand.vmem [shape: f32[1,128], index: 4, kind: input, shape index: {}]
  %s5 = inlined_call_operand.hbm [shape: f32[16,128], index: 5, kind: output, shape index: {}]
  %s6 = sld [smem:[#allocation0]]
  $region53: #{textcnn_forward.1} parent=0
    _
  %s8 = ssub.s32 1, %s6
  %s9 = scalar_select 0, %s8, %s6
  $region1: #{textcnn_forward.1} parent=0
    #allocation2 [shape = 'u8[8192]{0}', space=vmem, size = 0x2000, scoped, tag = 'output window, operand 0']
    #allocation3 [shape = 's32[2]{0}', space=sflag, size = 0x8, scoped, tag = 'scoped memory for textcnn_forward.1']
    %10 = vsyncpa [#allocation3], 0
    %s11 = scalar_lea.sflag [#allocation3], 1
    %12 = vsyncpa %s11, 0
    loop: start=0, step=1, limit=4
    $region2: #{textcnn_forward.1} parent=1 // loop_pre_header
      _
    $region3: #{textcnn_forward.1} parent=1 // loop_header
      %s14 = sphi 0, %s18
      %p15 = scmp.ge.s32.totalorder %s14, 4
      %s24 = sphi 0, %s26
      %s27 = sphi 0, %s24
      %s28 = sphi 0, %s27
      %s44 = sphi 0, %s28
      %s50 = sphi 0, %s52
      %s53 = sphi 0, %s50
      %s54 = sphi 0, %s53
      %s70 = sphi 0, %s54
      %s74 = sphi 0, %s74
      %s76 = sphi 0, %s74
      %s77 = sphi 0, %s76
      %s91 = sphi 0, %s77
      %s95 = sphi 0, %s95
      %s97 = sphi 0, %s95
      %s98 = sphi 0, %s97
      %s112 = sphi 0, %s98
      %s116 = sphi 0, %s116
      %s118 = sphi 0, %s116
      %s119 = sphi 0, %s118
      %s133 = sphi 0, %s119
      %s139 = sphi 0, %s141
      %s142 = sphi 0, %s139
      %s143 = sphi 0, %s142
      %s159 = sphi 0, %s143
    $region4: #{textcnn_forward.1} parent=1 // loop_header_branch
      %17 = sbr.rel (%p15) target = $region8
    $region5: #{textcnn_forward.1} parent=1 // loop_body
      %s19 = ssub.s32 %s14, 1
      %s20 = ssub.s32 %s14, 2
      %s21 = sadd.s32 %s14, 1
      %s22 = ssub.s32 %s14, %s21
      %p23 = scmp.eq.s32.totalorder %s22, 0
      %s25 = sadd.s32 %s24, 1
      %s26 = scalar_select %p23, %s24, %s25
      %p29 = pneg %p23
      %p30 = scmp.eq.s32.totalorder %s14, 1
      %p31 = por %p29, %p30
      %p32 = scmp.ne.s32.totalorder %s24, %s27
      %p33 = scmp.eq.s32.totalorder %s14, 0
      %p34 = por %p32, %p33
      %p35 = scmp.ne.s32.totalorder %s24, %s27
      %p36 = scmp.eq.s32.totalorder %s19, 1
      %p37 = por %p35, %p36
      %p38 = scmp.ne.s32.totalorder %s27, %s28
      %p39 = scmp.eq.s32.totalorder %s19, 0
      %p40 = por %p38, %p39
      %p41 = scmp.ne.s32.totalorder %s27, %s28
      %p42 = scmp.eq.s32.totalorder %s20, 1
      %p43 = por %p41, %p42
      %p45 = scmp.ne.s32.totalorder %s28, %s44
      %p46 = scmp.eq.s32.totalorder %s20, 0
      %p47 = por %p45, %p46
      %s48 = ssub.s32 %s14, %s21
      %p49 = scmp.eq.s32.totalorder %s48, 0
      %s51 = sadd.s32 %s50, 1
      %s52 = scalar_select %p49, %s50, %s51
      %p55 = pneg %p49
      %p56 = scmp.eq.s32.totalorder %s14, 1
      %p57 = por %p55, %p56
      %p58 = scmp.ne.s32.totalorder %s50, %s53
      %p59 = scmp.eq.s32.totalorder %s14, 0
      %p60 = por %p58, %p59
      %p61 = scmp.ne.s32.totalorder %s50, %s53
      %p62 = scmp.eq.s32.totalorder %s19, 1
      %p63 = por %p61, %p62
      %p64 = scmp.ne.s32.totalorder %s53, %s54
      %p65 = scmp.eq.s32.totalorder %s19, 0
      %p66 = por %p64, %p65
      %p67 = scmp.ne.s32.totalorder %s53, %s54
      %p68 = scmp.eq.s32.totalorder %s20, 1
      %p69 = por %p67, %p68
      %p71 = scmp.ne.s32.totalorder %s54, %s70
      %p72 = scmp.eq.s32.totalorder %s20, 0
      %p73 = por %p71, %p72
      %s75 = sadd.s32 %s74, 1
      %p78 = scmp.eq.s32.totalorder %s14, 1
      %p79 = scmp.ne.s32.totalorder %s74, %s76
      %p80 = scmp.eq.s32.totalorder %s14, 0
      %p81 = por %p79, %p80
      %p82 = scmp.ne.s32.totalorder %s74, %s76
      %p83 = scmp.eq.s32.totalorder %s19, 1
      %p84 = por %p82, %p83
      %p85 = scmp.ne.s32.totalorder %s76, %s77
      %p86 = scmp.eq.s32.totalorder %s19, 0
      %p87 = por %p85, %p86
      %p88 = scmp.ne.s32.totalorder %s76, %s77
      %p89 = scmp.eq.s32.totalorder %s20, 1
      %p90 = por %p88, %p89
      %p92 = scmp.ne.s32.totalorder %s77, %s91
      %p93 = scmp.eq.s32.totalorder %s20, 0
      %p94 = por %p92, %p93
      %s96 = sadd.s32 %s95, 1
      %p99 = scmp.eq.s32.totalorder %s14, 1
      %p100 = scmp.ne.s32.totalorder %s95, %s97
      %p101 = scmp.eq.s32.totalorder %s14, 0
      %p102 = por %p100, %p101
      %p103 = scmp.ne.s32.totalorder %s95, %s97
      %p104 = scmp.eq.s32.totalorder %s19, 1
      %p105 = por %p103, %p104
      %p106 = scmp.ne.s32.totalorder %s97, %s98
      %p107 = scmp.eq.s32.totalorder %s19, 0
      %p108 = por %p106, %p107
      %p109 = scmp.ne.s32.totalorder %s97, %s98
      %p110 = scmp.eq.s32.totalorder %s20, 1
      %p111 = por %p109, %p110
      %p113 = scmp.ne.s32.totalorder %s98, %s112
      %p114 = scmp.eq.s32.totalorder %s20, 0
      %p115 = por %p113, %p114
      %s117 = sadd.s32 %s116, 1
      %p120 = scmp.eq.s32.totalorder %s14, 1
      %p121 = scmp.ne.s32.totalorder %s116, %s118
      %p122 = scmp.eq.s32.totalorder %s14, 0
      %p123 = por %p121, %p122
      %p124 = scmp.ne.s32.totalorder %s116, %s118
      %p125 = scmp.eq.s32.totalorder %s19, 1
      %p126 = por %p124, %p125
      %p127 = scmp.ne.s32.totalorder %s118, %s119
      %p128 = scmp.eq.s32.totalorder %s19, 0
      %p129 = por %p127, %p128
      %p130 = scmp.ne.s32.totalorder %s118, %s119
      %p131 = scmp.eq.s32.totalorder %s20, 1
      %p132 = por %p130, %p131
      %p134 = scmp.ne.s32.totalorder %s119, %s133
      %p135 = scmp.eq.s32.totalorder %s20, 0
      %p136 = por %p134, %p135
      %s137 = ssub.s32 %s14, %s21
      %p138 = scmp.eq.s32.totalorder %s137, 0
      %s140 = sadd.s32 %s139, 1
      %s141 = scalar_select %p138, %s139, %s140
      %p144 = pneg %p138
      %p145 = scmp.eq.s32.totalorder %s14, 1
      %p146 = por %p144, %p145
      %p147 = scmp.ne.s32.totalorder %s139, %s142
      %p148 = scmp.eq.s32.totalorder %s14, 0
      %p149 = por %p147, %p148
      %p150 = scmp.ne.s32.totalorder %s139, %s142
      %p151 = scmp.eq.s32.totalorder %s19, 1
      %p152 = por %p150, %p151
      %p153 = scmp.ne.s32.totalorder %s142, %s143
      %p154 = scmp.eq.s32.totalorder %s19, 0
      %p155 = por %p153, %p154
      %p156 = scmp.ne.s32.totalorder %s142, %s143
      %p157 = scmp.eq.s32.totalorder %s20, 1
      %p158 = por %p156, %p157
      %p160 = scmp.ne.s32.totalorder %s143, %s159
      %p161 = scmp.eq.s32.totalorder %s20, 0
      %p162 = por %p160, %p161
      %p163 = scmp.le.s32.totalorder 1, %s14
      %p164 = scmp.lt.s32.totalorder %s14, 3
      %p165 = pnand %p163, %p164
      %p166 = pneg %p165
      // Predicated region
      $region9: #{textcnn_forward.1} parent=5 // pred_check
        _
      $region10: #{textcnn_forward.1} parent=5 // pred_check_branch
        %168 = sbr.rel (%p165) target = $region12
      $region11: #{textcnn_forward.1} parent=5 // pred_region
        %s169 = ssub.s32 %s14, 1
        // Predicated region
        $region13: #{textcnn_forward.1} parent=11 // pred_check
          %p170 = pneg %p87
        $region14: #{textcnn_forward.1} parent=11 // pred_check_branch
          %172 = sbr.rel (%p170) target = $region16
        $region15: #{textcnn_forward.1} parent=11 // pred_region
          _
        $region16: #{textcnn_forward.1} parent=11 // pred_fallthru
          _
        // Predicated region
        $region17: #{textcnn_forward.1} parent=11 // pred_check
          %p173 = pneg %p108
        $region18: #{textcnn_forward.1} parent=11 // pred_check_branch
          %175 = sbr.rel (%p173) target = $region20
        $region19: #{textcnn_forward.1} parent=11 // pred_region
          _
        $region20: #{textcnn_forward.1} parent=11 // pred_fallthru
          _
        // Predicated region
        $region21: #{textcnn_forward.1} parent=11 // pred_check
          %p176 = pneg %p129
        $region22: #{textcnn_forward.1} parent=11 // pred_check_branch
          %178 = sbr.rel (%p176) target = $region24
        $region23: #{textcnn_forward.1} parent=11 // pred_region
          _
        $region24: #{textcnn_forward.1} parent=11 // pred_fallthru
          _
      $region12: #{textcnn_forward.1} parent=5 // pred_fallthru
        _
      %p179 = scmp.lt.s32.totalorder %s14, 2
      // Predicated region
      $region25: #{textcnn_forward.1} parent=5 // pred_check
        %p180 = pneg %p179
      $region26: #{textcnn_forward.1} parent=5 // pred_check_branch
        %182 = sbr.rel (%p180) target = $region28
      $region27: #{textcnn_forward.1} parent=5 // pred_region
        // Predicated region
        $region29: #{textcnn_forward.1} parent=27 // pred_check
          %p183 = pneg %p34
        $region30: #{textcnn_forward.1} parent=27 // pred_check_branch
          %185 = sbr.rel (%p183) target = $region32
        $region31: #{textcnn_forward.1} parent=27 // pred_region
          %s186 = smul.u32 8, %s14
          %p187 = scmp.lt.s32.totalorder %s186, 15
          %s188 = scalar_select %p187, %s186, 15
          %s189 = smul.addr %s188, 2
          %s190 = smul.addr %s189, 8
          %s191 = scalar_lea.vmem %s0, %s190
          %s192 = smul.u32 8, %s14
        $region32: #{textcnn_forward.1} parent=27 // pred_fallthru
          _
        // Predicated region
        $region33: #{textcnn_forward.1} parent=27 // pred_check
          %p193 = pneg %p60
        $region34: #{textcnn_forward.1} parent=27 // pred_check_branch
          %195 = sbr.rel (%p193) target = $region36
        $region35: #{textcnn_forward.1} parent=27 // pred_region
          %p196 = scmp.lt.s32.totalorder %s14, 1
          %s197 = scalar_select %p196, %s14, 1
          %s198 = smul.addr %s197, 8
          %s199 = scalar_lea.vmem %s1, %s198
        $region36: #{textcnn_forward.1} parent=27 // pred_fallthru
          _
      $region28: #{textcnn_forward.1} parent=5 // pred_fallthru
        _
      %p200 = scmp.le.s32.totalorder 1, %s14
      %p201 = scmp.lt.s32.totalorder %s14, 3
      %p202 = pnand %p200, %p201
      %p203 = pneg %p202
      // Predicated region
      $region37: #{textcnn_forward.1} parent=5 // pred_check
        _
      $region38: #{textcnn_forward.1} parent=5 // pred_check_branch
        %205 = sbr.rel (%p202) target = $region40
      $region39: #{textcnn_forward.1} parent=5 // pred_region
        %s206 = ssub.s32 %s14, 1
        %s207 = smul.u32 8, %s19
        %p208 = scmp.lt.s32.totalorder %s207, 15
        %s209 = scalar_select %p208, %s207, 15
        %s210 = smul.addr %s209, 2
        %s211 = smul.addr %s210, 8
        %s212 = scalar_lea.vmem %s0, %s211
        %p213 = pneg %p40
        %p214 = pneg %p37
        %p215 = scmp.lt.s32.totalorder %s19, 1
        %s216 = scalar_select %p215, %s19, 1
        %s217 = smul.addr %s216, 8
        %s218 = scalar_lea.vmem %s1, %s217
        %p219 = pneg %p66
        %p220 = pneg %p63
        %p221 = pneg %p87
        %p222 = pneg %p84
        %p223 = pneg %p108
        %p224 = pneg %p105
        %p225 = pneg %p129
        %p226 = pneg %p126
        %p227 = pneg %p155
        %p228 = pneg %p152
        %s229 = sand.u32 %s142, 1
        %s230 = scalar_lea.sflag [#allocation3], %s229
        %s231 = sand.u32 %s142, 1
        %s232 = smul.addr %s231, 8
        %s233 = scalar_lea.vmem [#allocation2], %s232
        %s234 = smul.u32 8, %s19
        %p235 = scmp.lt.s32.totalorder %s234, 15
        %s236 = scalar_select %p235, %s234, 15
        %s237 = smul.addr %s236, 2
        %s238 = smul.addr %s237, 8
        %s239 = scalar_lea.vmem %s0, %s238
        %s240 = smul.u32 8, %s19
        %p241 = scmp.lt.s32.totalorder %s19, 1
        %s242 = scalar_select %p241, %s19, 1
        %s243 = smul.addr %s242, 8
        %s244 = scalar_lea.vmem %s1, %s243
        %v246 = vld [vmem:[%s239] sm:$0xff]
        %v247 = vld [vmem:[%s239 + $0x8] sm:$0xff]
        %v248 = vld [vmem:[%s239 + $0x10] sm:$0xff]
        %v249 = vld [vmem:[%s239 + $0x18] sm:$0xff]
        %v250 = vld [vmem:[%s239 + $0x20] sm:$0xff]
        %v251 = vld [vmem:[%s239 + $0x28] sm:$0xff]
        %v252 = vld [vmem:[%s239 + $0x30] sm:$0xff]
        %v253 = vld [vmem:[%s239 + $0x38] sm:$0xff]
        %v254 = vld [vmem:[%s239 + $0x40] sm:$0xff]
        %v255 = vld [vmem:[%s239 + $0x48] sm:$0xff]
        %v256 = vld [vmem:[%s239 + $0x50] sm:$0xff]
        %v257 = vld [vmem:[%s239 + $0x58] sm:$0xff]
        %v258 = vld [vmem:[%s239 + $0x60] sm:$0xff]
        %v259 = vld [vmem:[%s239 + $0x68] sm:$0xff]
        %v260 = vld [vmem:[%s239 + $0x70] sm:$0xff]
        %v261 = vld [vmem:[%s239 + $0x78] sm:$0xff]
        %v262 = vld [vmem:[%s244] sm:$0xff]
        %v263 = vlaneseq
        %v264 = vshrl.u32 %v263, 7
        %v265 = vsub.s32 0, %v264
        %v266 = vrot.slane %v262, %v265
        %268 = vbcast.lane.b32.xlu0 %v266, 256
        %v269 = vpop.permute.xlu0 %268
        %s271 = sor.u32 256, 8
        %272 = vbcast.lane.b32.xlu0 %v266, %s271
        %v273 = vpop.permute.xlu0 %272
        %v274 = vlaneseq
        %v275 = vshrl.u32 %v274, 7
        %v276 = vsub.s32 1, %v275
        %v277 = vrot.slane %v262, %v276
        %279 = vbcast.lane.b32.xlu0 %v277, 256
        %v280 = vpop.permute.xlu0 %279
        %s282 = sor.u32 256, 8
        %283 = vbcast.lane.b32.xlu0 %v277, %s282
        %v284 = vpop.permute.xlu0 %283
        %v285 = vlaneseq
        %v286 = vshrl.u32 %v285, 7
        %v287 = vsub.s32 2, %v286
        %v288 = vrot.slane %v262, %v287
        %290 = vbcast.lane.b32.xlu0 %v288, 256
        %v291 = vpop.permute.xlu0 %290
        %s293 = sor.u32 256, 8
        %294 = vbcast.lane.b32.xlu0 %v288, %s293
        %v295 = vpop.permute.xlu0 %294
        %v296 = vlaneseq
        %v297 = vshrl.u32 %v296, 7
        %v298 = vsub.s32 3, %v297
        %v299 = vrot.slane %v262, %v298
        %301 = vbcast.lane.b32.xlu0 %v299, 256
        %v302 = vpop.permute.xlu0 %301
        %s304 = sor.u32 256, 8
        %305 = vbcast.lane.b32.xlu0 %v299, %s304
        %v306 = vpop.permute.xlu0 %305
        %v307 = vlaneseq
        %v308 = vshrl.u32 %v307, 7
        %v309 = vsub.s32 4, %v308
        %v310 = vrot.slane %v262, %v309
        %312 = vbcast.lane.b32.xlu0 %v310, 256
        %v313 = vpop.permute.xlu0 %312
        %s315 = sor.u32 256, 8
        %316 = vbcast.lane.b32.xlu0 %v310, %s315
        %v317 = vpop.permute.xlu0 %316
        %v318 = vlaneseq
        %v319 = vshrl.u32 %v318, 7
        %v320 = vsub.s32 5, %v319
        %v321 = vrot.slane %v262, %v320
        %323 = vbcast.lane.b32.xlu0 %v321, 256
        %v324 = vpop.permute.xlu0 %323
        %s326 = sor.u32 256, 8
        %327 = vbcast.lane.b32.xlu0 %v321, %s326
        %v328 = vpop.permute.xlu0 %327
        %v329 = vlaneseq
        %v330 = vshrl.u32 %v329, 7
        %v331 = vsub.s32 6, %v330
        %v332 = vrot.slane %v262, %v331
        %334 = vbcast.lane.b32.xlu0 %v332, 256
        %v335 = vpop.permute.xlu0 %334
        %s337 = sor.u32 256, 8
        %338 = vbcast.lane.b32.xlu0 %v332, %s337
        %v339 = vpop.permute.xlu0 %338
        %v340 = vlaneseq
        %v341 = vshrl.u32 %v340, 7
        %v342 = vsub.s32 7, %v341
        %v343 = vrot.slane %v262, %v342
        %345 = vbcast.lane.b32.xlu0 %v343, 256
        %v346 = vpop.permute.xlu0 %345
        %s348 = sor.u32 256, 8
        %349 = vbcast.lane.b32.xlu0 %v343, %s348
        %v350 = vpop.permute.xlu0 %349
        %v351 = vmul.f32 %v246, %v269
        %v352 = vmul.f32 %v247, %v273
        %v353 = vmul.f32 %v248, %v280
        %v354 = vmul.f32 %v249, %v284
        %v355 = vmul.f32 %v250, %v291
        %v356 = vmul.f32 %v251, %v295
        %v357 = vmul.f32 %v252, %v302
        %v358 = vmul.f32 %v253, %v306
        %v359 = vmul.f32 %v254, %v313
        %v360 = vmul.f32 %v255, %v317
        %v361 = vmul.f32 %v256, %v324
        %v362 = vmul.f32 %v257, %v328
        %v363 = vmul.f32 %v258, %v335
        %v364 = vmul.f32 %v259, %v339
        %v365 = vmul.f32 %v260, %v346
        %v366 = vmul.f32 %v261, %v350
        %v367 = vpack.c.bf16 %v352, %v351
        %v368 = vpack.c.bf16 %v354, %v353
        %v369 = vpack.c.bf16 %v356, %v355
        %v370 = vpack.c.bf16 %v358, %v357
        %v371 = vpack.c.bf16 %v360, %v359
        %v372 = vpack.c.bf16 %v362, %v361
        %v373 = vpack.c.bf16 %v364, %v363
        %v374 = vpack.c.bf16 %v366, %v365
        %v376 = vshrl.u32 %v367, 16
        %v378 = vshll.u32 %v367, 16
        %v380 = vrot.slane %v378, 1
        %v381 = vor.u32 %v376, %v380
        %v383 = vshrl.u32 %v368, 16
        %v385 = vshll.u32 %v368, 16
        %v387 = vrot.slane %v385, 1
        %v388 = vor.u32 %v383, %v387
        %v390 = vshrl.u32 %v369, 16
        %v392 = vshll.u32 %v369, 16
        %v394 = vrot.slane %v392, 1
        %v395 = vor.u32 %v390, %v394
        %v397 = vshrl.u32 %v370, 16
        %v399 = vshll.u32 %v370, 16
        %v401 = vrot.slane %v399, 1
        %v402 = vor.u32 %v397, %v401
        %v404 = vshrl.u32 %v371, 16
        %v406 = vshll.u32 %v371, 16
        %v408 = vrot.slane %v406, 1
        %v409 = vor.u32 %v404, %v408
        %v411 = vshrl.u32 %v372, 16
        %v413 = vshll.u32 %v372, 16
        %v415 = vrot.slane %v413, 1
        %v416 = vor.u32 %v411, %v415
        %v418 = vshrl.u32 %v373, 16
        %v420 = vshll.u32 %v373, 16
        %v422 = vrot.slane %v420, 1
        %v423 = vor.u32 %v418, %v422
        %v425 = vshrl.u32 %v374, 16
        %v427 = vshll.u32 %v374, 16
        %v429 = vrot.slane %v427, 1
        %v430 = vor.u32 %v425, %v429
        %vm447 = vcmask 1047552
        %vm448 = vsmask.f32 7424
        %vm449 = vmand %vm447, %vm448
        %v450 = vsel %vm449, %v381, %v380
        %v451 = vsel %vm449, %v388, %v387
        %v452 = vsel %vm449, %v395, %v394
        %v453 = vsel %vm449, %v402, %v401
        %v454 = vsel %vm449, %v409, %v408
        %v455 = vsel %vm449, %v416, %v415
        %v456 = vsel %vm449, %v423, %v422
        %v457 = vsel %vm449, %v430, %v429
        %v466 = vrot.slane %v367, 1
        %v467 = vrot.slane %v368, 1
        %v468 = vrot.slane %v369, 1
        %v469 = vrot.slane %v370, 1
        %v470 = vrot.slane %v371, 1
        %v471 = vrot.slane %v372, 1
        %v472 = vrot.slane %v373, 1
        %v473 = vrot.slane %v374, 1
        %vm474 = vcmask 1046528
        %v476 = vsel %vm474, %v466, %v466
        %v478 = vsel %vm474, %v467, %v467
        %v480 = vsel %vm474, %v468, %v468
        %v482 = vsel %vm474, %v469, %v469
        %v484 = vsel %vm474, %v470, %v470
        %v486 = vsel %vm474, %v471, %v471
        %v488 = vsel %vm474, %v472, %v472
        %v490 = vsel %vm474, %v473, %v473
        %v491 = vrot.slane %v376, 1
        %v492 = vrot.slane %v378, 2
        %v493 = vor.u32 %v491, %v492
        %v494 = vrot.slane %v383, 1
        %v495 = vrot.slane %v385, 2
        %v496 = vor.u32 %v494, %v495
        %v497 = vrot.slane %v390, 1
        %v498 = vrot.slane %v392, 2
        %v499 = vor.u32 %v497, %v498
        %v500 = vrot.slane %v397, 1
        %v501 = vrot.slane %v399, 2
        %v502 = vor.u32 %v500, %v501
        %v503 = vrot.slane %v404, 1
        %v504 = vrot.slane %v406, 2
        %v505 = vor.u32 %v503, %v504
        %v506 = vrot.slane %v411, 1
        %v507 = vrot.slane %v413, 2
        %v508 = vor.u32 %v506, %v507
        %v509 = vrot.slane %v418, 1
        %v510 = vrot.slane %v420, 2
        %v511 = vor.u32 %v509, %v510
        %v512 = vrot.slane %v425, 1
        %v513 = vrot.slane %v427, 2
        %v514 = vor.u32 %v512, %v513
        %vm523 = vcmask 1046528
        %vm524 = vsmask.f32 6400
        %vm525 = vmand %vm523, %vm524
        %v526 = vsel %vm525, %v493, %v493
        %v527 = vsel %vm525, %v496, %v496
        %v528 = vsel %vm525, %v499, %v499
        %v529 = vsel %vm525, %v502, %v502
        %v530 = vsel %vm525, %v505, %v505
        %v531 = vsel %vm525, %v508, %v508
        %v532 = vsel %vm525, %v511, %v511
        %v533 = vsel %vm525, %v514, %v514
        %542 = vrot.lane.b32.xlu0 %v450, 32
        %v543 = vpop.permute.xlu0 %542
        %544 = vrot.lane.b32.xlu0 %v451, 32
        %v545 = vpop.permute.xlu0 %544
        %546 = vrot.lane.b32.xlu0 %v452, 32
        %v547 = vpop.permute.xlu0 %546
        %548 = vrot.lane.b32.xlu0 %v453, 32
        %v549 = vpop.permute.xlu0 %548
        %550 = vrot.lane.b32.xlu0 %v454, 32
        %v551 = vpop.permute.xlu0 %550
        %552 = vrot.lane.b32.xlu0 %v455, 32
        %v553 = vpop.permute.xlu0 %552
        %554 = vrot.lane.b32.xlu0 %v456, 32
        %v555 = vpop.permute.xlu0 %554
        %556 = vrot.lane.b32.xlu0 %v457, 32
        %v557 = vpop.permute.xlu0 %556
        %566 = vrot.lane.b32.xlu0 %v476, 64
        %v567 = vpop.permute.xlu0 %566
        %568 = vrot.lane.b32.xlu0 %v478, 64
        %v569 = vpop.permute.xlu0 %568
        %570 = vrot.lane.b32.xlu0 %v480, 64
        %v571 = vpop.permute.xlu0 %570
        %572 = vrot.lane.b32.xlu0 %v482, 64
        %v573 = vpop.permute.xlu0 %572
        %574 = vrot.lane.b32.xlu0 %v484, 64
        %v575 = vpop.permute.xlu0 %574
        %576 = vrot.lane.b32.xlu0 %v486, 64
        %v577 = vpop.permute.xlu0 %576
        %578 = vrot.lane.b32.xlu0 %v488, 64
        %v579 = vpop.permute.xlu0 %578
        %580 = vrot.lane.b32.xlu0 %v490, 64
        %v581 = vpop.permute.xlu0 %580
        %590 = vrot.lane.b32.xlu0 %v526, 96
        %v591 = vpop.permute.xlu0 %590
        %592 = vrot.lane.b32.xlu0 %v527, 96
        %v593 = vpop.permute.xlu0 %592
        %594 = vrot.lane.b32.xlu0 %v528, 96
        %v595 = vpop.permute.xlu0 %594
        %596 = vrot.lane.b32.xlu0 %v529, 96
        %v597 = vpop.permute.xlu0 %596
        %598 = vrot.lane.b32.xlu0 %v530, 96
        %v599 = vpop.permute.xlu0 %598
        %600 = vrot.lane.b32.xlu0 %v531, 96
        %v601 = vpop.permute.xlu0 %600
        %602 = vrot.lane.b32.xlu0 %v532, 96
        %v603 = vpop.permute.xlu0 %602
        %604 = vrot.lane.b32.xlu0 %v533, 96
        %v605 = vpop.permute.xlu0 %604
        %vm606 = vcmask 261120
        %v608 = vsel %vm606, %v367, %v543
        %v610 = vsel %vm606, %v368, %v545
        %v612 = vsel %vm606, %v369, %v547
        %v614 = vsel %vm606, %v370, %v549
        %v616 = vsel %vm606, %v371, %v551
        %v618 = vsel %vm606, %v372, %v553
        %v620 = vsel %vm606, %v373, %v555
        %v622 = vsel %vm606, %v374, %v557
        %vm623 = vcmask 523264
        %v625 = vsel %vm623, %v608, %v567
        %v627 = vsel %vm623, %v610, %v569
        %v629 = vsel %vm623, %v612, %v571
        %v631 = vsel %vm623, %v614, %v573
        %v633 = vsel %vm623, %v616, %v575
        %v635 = vsel %vm623, %v618, %v577
        %v637 = vsel %vm623, %v620, %v579
        %v639 = vsel %vm623, %v622, %v581
        %vm640 = vcmask 785408
        %v642 = vsel %vm640, %v625, %v591
        %v645 = vsel %vm640, %v627, %v593
        %v648 = vsel %vm640, %v629, %v595
        %v651 = vsel %vm640, %v631, %v597
        %v654 = vsel %vm640, %v633, %v599
        %v657 = vsel %vm640, %v635, %v601
        %v660 = vsel %vm640, %v637, %v603
        %v663 = vsel %vm640, %v639, %v605
        %v665 = vld [vmem:[%s2] sm:$0xf]
        %v666 = vld [vmem:[%s2 + $0x4] sm:$0xf]
        %v667 = vld [vmem:[%s2 + $0x8] sm:$0xf]
        %v668 = vld [vmem:[%s2 + $0xc] sm:$0xf]
        %v669 = vld [vmem:[%s2 + $0x10] sm:$0xf]
        %v670 = vld [vmem:[%s2 + $0x14] sm:$0xf]
        %v671 = vld [vmem:[%s2 + $0x18] sm:$0xf]
        %v672 = vld [vmem:[%s2 + $0x1c] sm:$0xf]
        %v673 = vld [vmem:[%s2 + $0x20] sm:$0xf]
        %v674 = vld [vmem:[%s2 + $0x24] sm:$0xf]
        %v675 = vld [vmem:[%s2 + $0x28] sm:$0xf]
        %v676 = vld [vmem:[%s2 + $0x2c] sm:$0xf]
        %v677 = vld [vmem:[%s2 + $0x30] sm:$0xf]
        %v678 = vld [vmem:[%s2 + $0x34] sm:$0xf]
        %v679 = vld [vmem:[%s2 + $0x38] sm:$0xf]
        %v680 = vld [vmem:[%s2 + $0x3c] sm:$0xf]
        %v697 = vunpack.c.l.b16 %v665
        %v698 = vunpack.c.l.b16 %v666
        %v699 = vunpack.c.l.b16 %v667
        %v700 = vunpack.c.l.b16 %v668
        %v701 = vunpack.c.l.b16 %v669
        %v702 = vunpack.c.l.b16 %v670
        %v703 = vunpack.c.l.b16 %v671
        %v704 = vunpack.c.l.b16 %v672
        %v705 = vunpack.c.l.b16 %v673
        %v706 = vunpack.c.l.b16 %v674
        %v707 = vunpack.c.l.b16 %v675
        %v708 = vunpack.c.l.b16 %v676
        %v709 = vunpack.c.l.b16 %v677
        %v710 = vunpack.c.l.b16 %v678
        %v711 = vunpack.c.l.b16 %v679
        %v712 = vunpack.c.l.b16 %v680
        %v713 = vpack.c.b16 %v698, %v697
        %v714 = vpack.c.b16 %v700, %v699
        %v715 = vpack.c.b16 %v702, %v701
        %v716 = vpack.c.b16 %v704, %v703
        %v717 = vpack.c.b16 %v706, %v705
        %v718 = vpack.c.b16 %v708, %v707
        %v719 = vpack.c.b16 %v710, %v709
        %v720 = vpack.c.b16 %v712, %v711
        %729 = vmatprep.subr.bf16.mxu0 0
        %730 = vmatpush1.bf16.msra.mxu0 %v720
        %731 = vmatprep.subr.bf16.mxu0 0
        %732 = vmatpush1.bf16.msra.mxu0 %v719
        %733 = vmatprep.subr.bf16.mxu0 0
        %734 = vmatpush1.bf16.msra.mxu0 %v718
        %735 = vmatprep.subr.bf16.mxu0 0
        %736 = vmatpush1.bf16.msra.mxu0 %v717
        %737 = vmatprep.subr.bf16.mxu0 0
        %738 = vmatpush1.bf16.msra.mxu0 %v716
        %739 = vmatprep.subr.bf16.mxu0 0
        %740 = vmatpush1.bf16.msra.mxu0 %v715
        %741 = vmatprep.subr.bf16.mxu0 0
        %742 = vmatpush1.bf16.msra.mxu0 %v714
        %743 = vmatprep.subr.bf16.mxu0 0
        %744 = vmatpush1.bf16.msra.mxu0 %v713
        %745 = vmatprep.subr.bf16.mxu0 0
        %746 = vmatpush2.bf16.msra.mxu0 0
        %747 = vmatprep.subr.bf16.mxu0 0
        %748 = vmatpush2.bf16.msra.mxu0 0
        %749 = vmatprep.subr.bf16.mxu0 0
        %750 = vmatpush2.bf16.msra.mxu0 0
        %751 = vmatprep.subr.bf16.mxu0 0
        %752 = vmatpush2.bf16.msra.mxu0 0
        %753 = vmatprep.subr.bf16.mxu0 0
        %754 = vmatpush2.bf16.msra.mxu0 0
        %755 = vmatprep.subr.bf16.mxu0 0
        %756 = vmatpush2.bf16.msra.mxu0 0
        %757 = vmatprep.subr.bf16.mxu0 0
        %758 = vmatpush2.bf16.msra.mxu0 0
        %759 = vmatprep.subr.bf16.mxu0 0
        %760 = vmatpush2.bf16.msra.mxu0 0
        %761 = vmatprep.mubr.bf16.mxu0 0
        %762 = vmatmul.mubr.bf16.gmra.mxu0 %v642
        %v763 = vpop.f32.mrf.mxu0
        %v764 = vadd.f32 0.0, %v763
        %v765 = vpop.f32.mrf.mxu0
        %v766 = vpop.f32.mrf.mxu0
        %v767 = vadd.f32 0.0, %v766
        %v768 = vpop.f32.mrf.mxu0
        %769 = vmatprep.mubr.bf16.mxu0 0
        %770 = vmatmul.mubr.bf16.gmra.mxu0 %v645
        %v771 = vpop.f32.mrf.mxu0
        %v772 = vadd.f32 0.0, %v771
        %v773 = vpop.f32.mrf.mxu0
        %v774 = vpop.f32.mrf.mxu0
        %v775 = vadd.f32 0.0, %v774
        %v776 = vpop.f32.mrf.mxu0
        %777 = vmatprep.mubr.bf16.mxu0 0
        %778 = vmatmul.mubr.bf16.gmra.mxu0 %v648
        %v779 = vpop.f32.mrf.mxu0
        %v780 = vadd.f32 0.0, %v779
        %v781 = vpop.f32.mrf.mxu0
        %v782 = vpop.f32.mrf.mxu0
        %v783 = vadd.f32 0.0, %v782
        %v784 = vpop.f32.mrf.mxu0
        %785 = vmatprep.mubr.bf16.mxu0 0
        %786 = vmatmul.mubr.bf16.gmra.mxu0 %v651
        %v787 = vpop.f32.mrf.mxu0
        %v788 = vadd.f32 0.0, %v787
        %v789 = vpop.f32.mrf.mxu0
        %v790 = vpop.f32.mrf.mxu0
        %v791 = vadd.f32 0.0, %v790
        %v792 = vpop.f32.mrf.mxu0
        %793 = vmatprep.mubr.bf16.mxu0 0
        %794 = vmatmul.mubr.bf16.gmra.mxu0 %v654
        %v795 = vpop.f32.mrf.mxu0
        %v796 = vadd.f32 0.0, %v795
        %v797 = vpop.f32.mrf.mxu0
        %v798 = vpop.f32.mrf.mxu0
        %v799 = vadd.f32 0.0, %v798
        %v800 = vpop.f32.mrf.mxu0
        %801 = vmatprep.mubr.bf16.mxu0 0
        %802 = vmatmul.mubr.bf16.gmra.mxu0 %v657
        %v803 = vpop.f32.mrf.mxu0
        %v804 = vadd.f32 0.0, %v803
        %v805 = vpop.f32.mrf.mxu0
        %v806 = vpop.f32.mrf.mxu0
        %v807 = vadd.f32 0.0, %v806
        %v808 = vpop.f32.mrf.mxu0
        %809 = vmatprep.mubr.bf16.mxu0 0
        %810 = vmatmul.mubr.bf16.gmra.mxu0 %v660
        %v811 = vpop.f32.mrf.mxu0
        %v812 = vadd.f32 0.0, %v811
        %v813 = vpop.f32.mrf.mxu0
        %v814 = vpop.f32.mrf.mxu0
        %v815 = vadd.f32 0.0, %v814
        %v816 = vpop.f32.mrf.mxu0
        %817 = vmatprep.mubr.bf16.mxu0 0
        %818 = vmatmul.mubr.bf16.gmra.mxu0 %v663
        %v819 = vpop.f32.mrf.mxu0
        %v820 = vadd.f32 0.0, %v819
        %v821 = vpop.f32.mrf.mxu0
        %v822 = vpop.f32.mrf.mxu0
        %v823 = vadd.f32 0.0, %v822
        %v824 = vpop.f32.mrf.mxu0
        %825 = vdwg.mxu0
        %v826 = vld [vmem:[%s3] sm:$0xff]
        %v827 = vld [vmem:[%s3 + $0x8] sm:$0xff]
        %v828 = vadd.f32 %v764, %v826
        %v829 = vadd.f32 %v767, %v827
        %v830 = vadd.f32 %v772, %v826
        %v831 = vadd.f32 %v775, %v827
        %v832 = vadd.f32 %v780, %v826
        %v833 = vadd.f32 %v783, %v827
        %v834 = vadd.f32 %v788, %v826
        %v835 = vadd.f32 %v791, %v827
        %v836 = vadd.f32 %v796, %v826
        %v837 = vadd.f32 %v799, %v827
        %v838 = vadd.f32 %v804, %v826
        %v839 = vadd.f32 %v807, %v827
        %v840 = vadd.f32 %v812, %v826
        %v841 = vadd.f32 %v815, %v827
        %v842 = vadd.f32 %v820, %v826
        %v843 = vadd.f32 %v823, %v827
        %v844 = vmax.f32 %v828, %v829
        %v845 = vrot.slane %v844, 4
        %v846 = vmax.f32 %v844, %v845
        %v847 = vrot.slane %v846, 2
        %v848 = vmax.f32 %v846, %v847
        %v849 = vrot.slane %v848, 1
        %v850 = vmax.f32 %v848, %v849
        %v851 = vmax.f32 %v830, %v831
        %v852 = vrot.slane %v851, 4
        %v853 = vmax.f32 %v851, %v852
        %v854 = vrot.slane %v853, 2
        %v855 = vmax.f32 %v853, %v854
        %v856 = vrot.slane %v855, 1
        %v857 = vmax.f32 %v855, %v856
        %v858 = vmax.f32 %v832, %v833
        %v859 = vrot.slane %v858, 4
        %v860 = vmax.f32 %v858, %v859
        %v861 = vrot.slane %v860, 2
        %v862 = vmax.f32 %v860, %v861
        %v863 = vrot.slane %v862, 1
        %v864 = vmax.f32 %v862, %v863
        %v865 = vmax.f32 %v834, %v835
        %v866 = vrot.slane %v865, 4
        %v867 = vmax.f32 %v865, %v866
        %v868 = vrot.slane %v867, 2
        %v869 = vmax.f32 %v867, %v868
        %v870 = vrot.slane %v869, 1
        %v871 = vmax.f32 %v869, %v870
        %v872 = vmax.f32 %v836, %v837
        %v873 = vrot.slane %v872, 4
        %v874 = vmax.f32 %v872, %v873
        %v875 = vrot.slane %v874, 2
        %v876 = vmax.f32 %v874, %v875
        %v877 = vrot.slane %v876, 1
        %v878 = vmax.f32 %v876, %v877
        %v879 = vmax.f32 %v838, %v839
        %v880 = vrot.slane %v879, 4
        %v881 = vmax.f32 %v879, %v880
        %v882 = vrot.slane %v881, 2
        %v883 = vmax.f32 %v881, %v882
        %v884 = vrot.slane %v883, 1
        %v885 = vmax.f32 %v883, %v884
        %v886 = vmax.f32 %v840, %v841
        %v887 = vrot.slane %v886, 4
        %v888 = vmax.f32 %v886, %v887
        %v889 = vrot.slane %v888, 2
        %v890 = vmax.f32 %v888, %v889
        %v891 = vrot.slane %v890, 1
        %v892 = vmax.f32 %v890, %v891
        %v893 = vmax.f32 %v842, %v843
        %v894 = vrot.slane %v893, 4
        %v895 = vmax.f32 %v893, %v894
        %v896 = vrot.slane %v895, 2
        %v897 = vmax.f32 %v895, %v896
        %v898 = vrot.slane %v897, 1
        %v899 = vmax.f32 %v897, %v898
        %v900 = vld [vmem:[%s4] sm:$0x1]
        %v902 = vlaneseq
        %v903 = vshrl.u32 %v902, 7
        %v904 = vsub.s32 0, %v903
        %v905 = vrot.slane %v900, %v904
        %v907 = vadd.f32 %v850, %v905
        %v908 = vadd.f32 %v857, %v905
        %v909 = vadd.f32 %v864, %v905
        %v910 = vadd.f32 %v871, %v905
        %v911 = vadd.f32 %v878, %v905
        %v912 = vadd.f32 %v885, %v905
        %v913 = vadd.f32 %v892, %v905
        %v914 = vadd.f32 %v899, %v905
        %v923 = vrot.slane %v908, 7
        %vm924 = vcmask 1041409
        %v925 = vsel %vm924, %v923, %v907
        %v926 = vrot.slane %v909, 6
        %vm927 = vcmask 1042434
        %v928 = vsel %vm927, %v926, %v925
        %v929 = vrot.slane %v910, 5
        %vm930 = vcmask 1043459
        %v931 = vsel %vm930, %v929, %v928
        %v932 = vrot.slane %v911, 4
        %vm933 = vcmask 1044484
        %v934 = vsel %vm933, %v932, %v931
        %v935 = vrot.slane %v912, 3
        %vm936 = vcmask 1045509
        %v937 = vsel %vm936, %v935, %v934
        %v938 = vrot.slane %v913, 2
        %vm939 = vcmask 1046534
        %v940 = vsel %vm939, %v938, %v937
        %v941 = vrot.slane %v914, 1
        %vm942 = vcmask 1047559
        %v943 = vsel %vm942, %v941, %v940
        %945 = vst [vmem:[%s233] sm:$0xff] %v943
        %s946 = sand.u32 %s142, 1
        %s947 = scalar_lea.sflag [#allocation3], %s946
        %s948 = sand.u32 %s142, 1
        %s949 = smul.addr %s948, 8
        %s950 = scalar_lea.vmem [#allocation2], %s949
        // Predicated region
        $region41: #{textcnn_forward.1} parent=39 // pred_check
          %p951 = pneg %p152
        $region42: #{textcnn_forward.1} parent=39 // pred_check_branch
          %953 = sbr.rel (%p951) target = $region44
        $region43: #{textcnn_forward.1} parent=39 // pred_region
          %s955 = ssub.s32 128, 128
          %956 = vsyncadd %s947, %s955
          %s957 = smul.addr %s19, 128
          %s958 = scalar_lea.hbm %s5, %s957
          %s960 = sshll.u32 %s950, 4
          %s961 = int_to_ptr.vmem [resolvable:$true] %s960
          %963 = dma.vmem_to_hbm [thread:$0]  %s961, 128, %s958, %s947
        $region44: #{textcnn_forward.1} parent=39 // pred_fallthru
          _
      $region40: #{textcnn_forward.1} parent=5 // pred_fallthru
        _
      %p964 = scmp.le.s32.totalorder 2, %s14
      // Predicated region
      $region45: #{textcnn_forward.1} parent=5 // pred_check
        %p965 = pneg %p964
      $region46: #{textcnn_forward.1} parent=5 // pred_check_branch
        %967 = sbr.rel (%p965) target = $region48
      $region47: #{textcnn_forward.1} parent=5 // pred_region
        %s968 = ssub.s32 %s14, 2
        // Predicated region
        $region49: #{textcnn_forward.1} parent=47 // pred_check
          %p969 = pneg %p158
        $region50: #{textcnn_forward.1} parent=47 // pred_check_branch
          %971 = sbr.rel (%p969) target = $region52
        $region51: #{textcnn_forward.1} parent=47 // pred_region
          %s972 = sand.u32 %s143, 1
          %s973 = scalar_lea.sflag [#allocation3], %s972
          %s974 = sand.u32 %s143, 1
          %s975 = smul.addr %s974, 8
          %s976 = scalar_lea.vmem [#allocation2], %s975
          %977 = dma.done %s973, 128
        $region52: #{textcnn_forward.1} parent=47 // pred_fallthru
          _
      $region48: #{textcnn_forward.1} parent=5 // pred_fallthru
        _
    $region6: #{textcnn_forward.1} parent=1 // loop_footer
      %s18 = sadd.s32 1, %s14
    $region7: #{textcnn_forward.1} parent=1 // loop_footer_branch
      %13 = sbr.rel target = $region3
    $region8: #{textcnn_forward.1} parent=1 // loop_exit
      _
    %978 = vsyncpa [#allocation3], 1
    %s979 = scalar_lea.sflag [#allocation3], 1
    %980 = vsyncpa %s979, 1

</llo_original>
